<compile_context>
chip_gen: v7x
topology: tpu7x:2x2x1
jax: 0.10.0
libtpu: 0.0.40
codegen_flags: <defaults>
</compile_context>

<pallas_src>
import jax
import jax.numpy as jnp
from jax.experimental import pallas as pl
from jax.experimental.pallas import tpu as pltpu

_LANE = 128


def _make_ppo_kernel(num_hidden, action_size, matmul_dtype):
    """Kernel factory: supports an arbitrary number of hidden layers.

    Ref order: x^T, (w_i, b_i) * num_hidden, w_heads, b_heads, out_packed.
    All activations are [features, batch] (batch on lanes).
    """

    def kernel(*refs):
        xt_ref = refs[0]
        wh_ref = refs[1 + 2 * num_hidden]
        bh_ref = refs[2 + 2 * num_hidden]
        out_ref = refs[3 + 2 * num_hidden]

        # Shared hidden layers: h^T = relu(W @ h^T + b), W is [out, in].
        h = xt_ref[...]
        for l in range(num_hidden):
            w = refs[1 + 2 * l][...]
            b = refs[2 + 2 * l][...]
            h = jnp.dot(w.astype(matmul_dtype), h.astype(matmul_dtype),
                        preferred_element_type=jnp.float32) + b.astype(jnp.float32)
            h = jnp.maximum(h, 0.0)

        # Fused policy+value head: one MXU pass -> [A+1, bt].
        heads = jnp.dot(wh_ref[...].astype(matmul_dtype), h.astype(matmul_dtype),
                        preferred_element_type=jnp.float32) + bh_ref[...].astype(jnp.float32)

        # Masked softmax over the first `action_size` sublanes (policy rows);
        # the value row (sublane A) passes through untouched.
        row = jax.lax.broadcasted_iota(jnp.int32, heads.shape, 0)
        is_policy = row < action_size
        logits = jnp.where(is_policy, heads, -jnp.inf)
        m = jnp.max(logits, axis=0, keepdims=True)
        e = jnp.exp(logits - m)                 # exp(-inf) = 0 on the value row
        denom = jnp.sum(e, axis=0, keepdims=True)
        policy = e / denom                      # exact divide: rows sum to 1

        out_ref[...] = jnp.where(is_policy, policy, heads).astype(out_ref.dtype)

    return kernel


def _resident_spec(shape):
    # Full-array block, same block every grid step -> stays in VMEM.
    return pl.BlockSpec(shape, lambda i: (0, 0))


def _choose_batch_tile(batch, block_b):
    """Pick a lane-aligned batch tile.

    Tiny batches get a single un-padded step (lane dim == full array dim is
    allowed).  Larger batches get a 128-aligned tile, capped at ceil(B/2) so
    the grid has >= 2 steps and v7x megacore can shard the 'parallel' axis.
    """
    if batch < 2 * _LANE:
        return batch, batch
    bt = min(block_b, -(-batch // 2))            # >= 2 grid steps
    bt = max(_LANE, (bt // _LANE) * _LANE)       # lane-align
    b_pad = -(-batch // bt) * bt
    return bt, b_pad


def ppo_forward(x, params, *, block_b=8192, matmul_dtype=jnp.float32):
    """Runs the fused PPO forward kernel. Returns (policy, value).

    Weights use PyTorch layout: w [out, in], b [out, 1].
    Pass matmul_dtype=jnp.bfloat16 on v6e/v7x to halve the x HBM stream; all
    accumulation and elementwise math stays f32 either way.
    """
    hidden, (wp, bp), (wv, bv) = params
    B, S = x.shape
    A = wp.shape[0]
    num_hidden = len(hidden)

    # Fuse the two heads once (outside the kernel): [A+1, H], [A+1, 1].
    w_heads = jnp.concatenate([wp, wv], axis=0).astype(matmul_dtype)
    b_heads = jnp.concatenate([bp, bv], axis=0)

    # Batch-on-lanes: stream x^T [S, B]; cast at the source for bf16 streaming.
    x_t = x.T.astype(matmul_dtype)

    bt, B_pad = _choose_batch_tile(B, block_b)
    if B_pad != B:
        x_t = jnp.pad(x_t, ((0, 0), (0, B_pad - B)))
    grid = (B_pad // bt,)

    hidden_flat = []
    for w, b in hidden:
        hidden_flat += [w.astype(matmul_dtype), b]

    in_specs = [pl.BlockSpec((S, bt), lambda i: (0, i))]            # x^T: batch-tiled
    in_specs += [_resident_spec(p.shape) for p in hidden_flat]      # weights resident
    in_specs += [_resident_spec(w_heads.shape), _resident_spec(b_heads.shape)]

    out_spec = pl.BlockSpec((A + 1, bt), lambda i: (0, i))          # packed, lane-dense
    out_shape = jax.ShapeDtypeStruct((A + 1, B_pad), jnp.float32)

    kernel = _make_ppo_kernel(num_hidden, A, matmul_dtype)

    packed = pl.pallas_call(
        kernel,
        out_shape=out_shape,
        grid=grid,
        in_specs=in_specs,
        out_specs=out_spec,
        compiler_params=pltpu.CompilerParams(
            dimension_semantics=("parallel",),
        ),
    )(x_t, *hidden_flat, w_heads, b_heads)

    policy = packed[:A, :B].T
    value = packed[A:, :B].T
    return policy, value


def init_params(key, state_size, action_size, hidden_layers):
    """PyTorch nn.Linear-style init: uniform(-1/sqrt(fan_in), 1/sqrt(fan_in)).
    Weights stored in PyTorch layout [out, in]; biases [out, 1]."""
    dims = [state_size] + list(hidden_layers)
    n_linear = len(hidden_layers) + 2
    keys = jax.random.split(key, 2 * n_linear)
    ki = 0

    def linear(in_d, out_d):
        nonlocal ki
        bound = 1.0 / float(in_d) ** 0.5
        w = jax.random.uniform(keys[ki], (out_d, in_d), jnp.float32, -bound, bound); ki += 1
        b = jax.random.uniform(keys[ki], (out_d, 1), jnp.float32, -bound, bound); ki += 1
        return w, b

    hidden = [linear(i, o) for i, o in zip(dims[:-1], dims[1:])]
    wp, bp = linear(dims[-1], action_size)
    wv, bv = linear(dims[-1], 1)
    return tuple(hidden), (wp, bp), (wv, bv)


def ppo_reference(x, params):
    """Pure-JAX reference (exact semantics of the PyTorch module)."""
    hidden, (wp, bp), (wv, bv) = params
    h = x
    for w, b in hidden:
        h = jnp.maximum(h @ w.T + b.T, 0.0)
    policy = jax.nn.softmax(h @ wp.T + bp.T, axis=-1)
    value = h @ wv.T + bv.T
    return policy, value


if __name__ == "__main__":
    # Small shapes consistent with the module.
    batch = 8
    state_size = 16
    action_size = 8
    hidden_layers = (32, 32)

    key = jax.random.PRNGKey(0)
    kx, kp = jax.random.split(key)
    x = jax.random.normal(kx, (batch, state_size), dtype=jnp.float32)
    params = init_params(kp, state_size, action_size, hidden_layers)

    policy, value = ppo_forward(x, params)
    jax.block_until_ready((policy, value))

    ref_policy, ref_value = ppo_reference(x, params)
    assert policy.shape == (batch, action_size)
    assert value.shape == (batch, 1)
    # f32 matmuls + exact softmax divide -> tight tolerances.
    assert jnp.allclose(value, ref_value, atol=1e-4, rtol=1e-4)
    assert jnp.allclose(policy, ref_policy, atol=1e-4, rtol=1e-4)
    assert jnp.allclose(jnp.sum(policy, axis=-1), 1.0, atol=1e-5)

    print("KERNEL_OK")
</pallas_src>

<mosaic_0001>
module attributes {stable_mosaic.version = 11 : i64} {
  func.func @kernel(%arg0: i32, %arg1: memref<16x8xf32, #tpu.memory_space<vmem>>, %arg2: memref<32x16xf32, #tpu.memory_space<vmem>>, %arg3: memref<32x1xf32, #tpu.memory_space<vmem>>, %arg4: memref<32x32xf32, #tpu.memory_space<vmem>>, %arg5: memref<32x1xf32, #tpu.memory_space<vmem>>, %arg6: memref<9x32xf32, #tpu.memory_space<vmem>>, %arg7: memref<9x1xf32, #tpu.memory_space<vmem>>, %arg8: memref<9x8xf32, #tpu.memory_space<vmem>>) attributes {dimension_semantics = [#tpu.dimension_semantics<parallel>], iteration_bounds = array<i64: 1>, scalar_prefetch = 0 : i64, scratch_operands = 0 : i64, tpu.core_type = #tpu.core_type<tc>, window_params = [{transform_indices = @transform_0, window_bounds = array<i64: 16, 8>}, {pipeline_mode = #tpu.pipeline_mode<synchronous>, transform_indices = @transform_1, window_bounds = array<i64: 32, 16>}, {pipeline_mode = #tpu.pipeline_mode<synchronous>, transform_indices = @transform_2, window_bounds = array<i64: 32, 1>}, {pipeline_mode = #tpu.pipeline_mode<synchronous>, transform_indices = @transform_3, window_bounds = array<i64: 32, 32>}, {pipeline_mode = #tpu.pipeline_mode<synchronous>, transform_indices = @transform_4, window_bounds = array<i64: 32, 1>}, {pipeline_mode = #tpu.pipeline_mode<synchronous>, transform_indices = @transform_5, window_bounds = array<i64: 9, 32>}, {pipeline_mode = #tpu.pipeline_mode<synchronous>, transform_indices = @transform_6, window_bounds = array<i64: 9, 1>}, {transform_indices = @transform_7, window_bounds = array<i64: 9, 8>}]} {
    %c0 = arith.constant 0 : index
    %c0_0 = arith.constant 0 : index
    %0 = vector.load %arg1[%c0, %c0_0] : memref<16x8xf32, #tpu.memory_space<vmem>>, vector<16x8xf32>
    %c0_1 = arith.constant 0 : index
    %c0_2 = arith.constant 0 : index
    %1 = vector.load %arg2[%c0_1, %c0_2] : memref<32x16xf32, #tpu.memory_space<vmem>>, vector<32x16xf32>
    %c0_3 = arith.constant 0 : index
    %c0_4 = arith.constant 0 : index
    %2 = vector.load %arg3[%c0_3, %c0_4] : memref<32x1xf32, #tpu.memory_space<vmem>>, vector<32x1xf32>
    %cst = arith.constant dense<0.000000e+00> : vector<32x8xf32>
    %3 = tpu.matmul %1, %0, %cst {dimension_numbers = #tpu.dot_dimension_numbers<[1], [0], [0], [1], [0, 0, 1, 1], [], []>} : vector<32x16xf32>, vector<16x8xf32>, vector<32x8xf32> -> vector<32x8xf32>
    %4 = vector.broadcast %2 : vector<32x1xf32> to vector<32x8xf32>
    %5 = arith.addf %3, %4 : vector<32x8xf32>
    %cst_5 = arith.constant 0.000000e+00 : f32
    %6 = vector.broadcast %cst_5 : f32 to vector<32x8xf32>
    %7 = arith.maximumf %5, %6 : vector<32x8xf32>
    %c0_6 = arith.constant 0 : index
    %c0_7 = arith.constant 0 : index
    %8 = vector.load %arg4[%c0_6, %c0_7] : memref<32x32xf32, #tpu.memory_space<vmem>>, vector<32x32xf32>
    %c0_8 = arith.constant 0 : index
    %c0_9 = arith.constant 0 : index
    %9 = vector.load %arg5[%c0_8, %c0_9] : memref<32x1xf32, #tpu.memory_space<vmem>>, vector<32x1xf32>
    %cst_10 = arith.constant dense<0.000000e+00> : vector<32x8xf32>
    %10 = tpu.matmul %8, %7, %cst_10 {dimension_numbers = #tpu.dot_dimension_numbers<[1], [0], [0], [1], [0, 0, 1, 1], [], []>} : vector<32x32xf32>, vector<32x8xf32>, vector<32x8xf32> -> vector<32x8xf32>
    %11 = vector.broadcast %9 : vector<32x1xf32> to vector<32x8xf32>
    %12 = arith.addf %10, %11 : vector<32x8xf32>
    %cst_11 = arith.constant 0.000000e+00 : f32
    %13 = vector.broadcast %cst_11 : f32 to vector<32x8xf32>
    %14 = arith.maximumf %12, %13 : vector<32x8xf32>
    %c0_12 = arith.constant 0 : index
    %c0_13 = arith.constant 0 : index
    %15 = vector.load %arg6[%c0_12, %c0_13] : memref<9x32xf32, #tpu.memory_space<vmem>>, vector<9x32xf32>
    %cst_14 = arith.constant dense<0.000000e+00> : vector<9x8xf32>
    %16 = tpu.matmul %15, %14, %cst_14 {dimension_numbers = #tpu.dot_dimension_numbers<[1], [0], [0], [1], [0, 0, 1, 1], [], []>} : vector<9x32xf32>, vector<32x8xf32>, vector<9x8xf32> -> vector<9x8xf32>
    %c0_15 = arith.constant 0 : index
    %c0_16 = arith.constant 0 : index
    %17 = vector.load %arg7[%c0_15, %c0_16] : memref<9x1xf32, #tpu.memory_space<vmem>>, vector<9x1xf32>
    %18 = vector.broadcast %17 : vector<9x1xf32> to vector<9x8xf32>
    %19 = arith.addf %16, %18 : vector<9x8xf32>
    %20 = tpu.iota {dimensions = array<i32: 0>} : vector<9x8xi32>
    %c8_i32 = arith.constant 8 : i32
    %21 = vector.broadcast %c8_i32 : i32 to vector<9x8xi32>
    %22 = arith.cmpi slt, %20, %21 : vector<9x8xi32>
    %cst_17 = arith.constant 0xFF800000 : f32
    %23 = vector.broadcast %cst_17 : f32 to vector<9x8xf32>
    %24 = arith.select %22, %19, %23 : vector<9x8xi1>, vector<9x8xf32>
    %cst_18 = arith.constant dense<0xFF800000> : vector<8xf32>
    %25 = vector.multi_reduction <maximumf>, %24, %cst_18 [0] : vector<9x8xf32> to vector<8xf32>
    %26 = vector.shape_cast %25 : vector<8xf32> to vector<1x8xf32>
    %27 = vector.broadcast %26 : vector<1x8xf32> to vector<9x8xf32>
    %28 = arith.subf %24, %27 : vector<9x8xf32>
    %29 = math.exp %28 : vector<9x8xf32>
    %cst_19 = arith.constant dense<0.000000e+00> : vector<8xf32>
    %30 = vector.multi_reduction <add>, %29, %cst_19 [0] : vector<9x8xf32> to vector<8xf32>
    %31 = vector.shape_cast %30 : vector<8xf32> to vector<1x8xf32>
    %32 = vector.broadcast %31 : vector<1x8xf32> to vector<9x8xf32>
    %33 = arith.divf %29, %32 : vector<9x8xf32>
    %34 = arith.select %22, %33, %19 : vector<9x8xi1>, vector<9x8xf32>
    %c0_20 = arith.constant 0 : index
    %c0_21 = arith.constant 0 : index
    %35 = vector.load %arg8[%c0_20, %c0_21] : memref<9x8xf32, #tpu.memory_space<vmem>>, vector<9x8xf32>
    tpu.vector_store %arg8[%c0_20, %c0_21], %34 {strides = array<i32>} : memref<9x8xf32, #tpu.memory_space<vmem>>, vector<9x8xf32>,
    return
  }
  func.func @transform_0(%arg0: i32) -> (i32, i32) {
    %c0_i32 = arith.constant 0 : i32
    %c0_i32_0 = arith.constant 0 : i32
    return %c0_i32, %arg0 : i32, i32
  }
  func.func @transform_1(%arg0: i32) -> (i32, i32) {
    %c0_i32 = arith.constant 0 : i32
    %c0_i32_0 = arith.constant 0 : i32
    %c0_i32_1 = arith.constant 0 : i32
    return %c0_i32, %c0_i32_0 : i32, i32
  }
  func.func @transform_2(%arg0: i32) -> (i32, i32) {
    %c0_i32 = arith.constant 0 : i32
    %c0_i32_0 = arith.constant 0 : i32
    %c0_i32_1 = arith.constant 0 : i32
    return %c0_i32, %c0_i32_0 : i32, i32
  }
  func.func @transform_3(%arg0: i32) -> (i32, i32) {
    %c0_i32 = arith.constant 0 : i32
    %c0_i32_0 = arith.constant 0 : i32
    %c0_i32_1 = arith.constant 0 : i32
    return %c0_i32, %c0_i32_0 : i32, i32
  }
  func.func @transform_4(%arg0: i32) -> (i32, i32) {
    %c0_i32 = arith.constant 0 : i32
    %c0_i32_0 = arith.constant 0 : i32
    %c0_i32_1 = arith.constant 0 : i32
    return %c0_i32, %c0_i32_0 : i32, i32
  }
  func.func @transform_5(%arg0: i32) -> (i32, i32) {
    %c0_i32 = arith.constant 0 : i32
    %c0_i32_0 = arith.constant 0 : i32
    %c0_i32_1 = arith.constant 0 : i32
    return %c0_i32, %c0_i32_0 : i32, i32
  }
  func.func @transform_6(%arg0: i32) -> (i32, i32) {
    %c0_i32 = arith.constant 0 : i32
    %c0_i32_0 = arith.constant 0 : i32
    %c0_i32_1 = arith.constant 0 : i32
    return %c0_i32, %c0_i32_0 : i32, i32
  }
  func.func @transform_7(%arg0: i32) -> (i32, i32) {
    %c0_i32 = arith.constant 0 : i32
    %c0_i32_0 = arith.constant 0 : i32
    return %c0_i32, %arg0 : i32, i32
  }
}

</mosaic_0001>

<llo_original>
// kernel: tpu_custom_call.1
$region0: #{tpu_custom_call.1}
  #allocation0 [shape = 'u32[]', space=smem, size = 0x4, offset = 0x4, fixed_abs, tag = 'smem constant byte address 0x4 - core index']
  #allocation1 [shape = 'u32[144,128]{1,0:T(1,128)}', space=vmem, size = 0x12000, scoped, tag = 'internal scratch']
  %s0 = inlined_call_operand.vmem [shape: f32[16,8], index: 0, kind: input, shape index: {}]
  %s1 = inlined_call_operand.vmem [shape: f32[32,16], index: 1, kind: input, shape index: {}]
  %s2 = inlined_call_operand.vmem [shape: f32[32,1], index: 2, kind: input, shape index: {}]
  %s3 = inlined_call_operand.vmem [shape: f32[32,32], index: 3, kind: input, shape index: {}]
  %s4 = inlined_call_operand.vmem [shape: f32[32,1], index: 4, kind: input, shape index: {}]
  %s5 = inlined_call_operand.vmem [shape: f32[9,32], index: 5, kind: input, shape index: {}]
  %s6 = inlined_call_operand.vmem [shape: f32[9,1], index: 6, kind: input, shape index: {}]
  %s7 = inlined_call_operand.vmem [shape: f32[9,8], index: 7, kind: output, shape index: {}]
  %s8 = sld [smem:[#allocation0]]
  $region38: #{tpu_custom_call.1} parent=0
    _
  %s10 = ssub.s32 1, %s8
  %s11 = scalar_select 0, %s10, %s8
  // Predicated region
  $region2: #{tpu_custom_call.1} parent=0 // pred_check
    _
  $region3: #{tpu_custom_call.1} parent=0 // pred_check_branch
    %13 = sbr.rel (0) target = $region5
  $region4: #{tpu_custom_call.1} parent=0 // pred_region
    _
  $region5: #{tpu_custom_call.1} parent=0 // pred_fallthru
    _
  // Predicated region
  $region6: #{tpu_custom_call.1} parent=0 // pred_check
    _
  $region7: #{tpu_custom_call.1} parent=0 // pred_check_branch
    %15 = sbr.rel (0) target = $region9
  $region8: #{tpu_custom_call.1} parent=0 // pred_region
    _
  $region9: #{tpu_custom_call.1} parent=0 // pred_fallthru
    _
  // Predicated region
  $region10: #{tpu_custom_call.1} parent=0 // pred_check
    _
  $region11: #{tpu_custom_call.1} parent=0 // pred_check_branch
    %17 = sbr.rel (0) target = $region13
  $region12: #{tpu_custom_call.1} parent=0 // pred_region
    _
  $region13: #{tpu_custom_call.1} parent=0 // pred_fallthru
    _
  // Predicated region
  $region14: #{tpu_custom_call.1} parent=0 // pred_check
    _
  $region15: #{tpu_custom_call.1} parent=0 // pred_check_branch
    %19 = sbr.rel (0) target = $region17
  $region16: #{tpu_custom_call.1} parent=0 // pred_region
    _
  $region17: #{tpu_custom_call.1} parent=0 // pred_fallthru
    _
  // Predicated region
  $region18: #{tpu_custom_call.1} parent=0 // pred_check
    _
  $region19: #{tpu_custom_call.1} parent=0 // pred_check_branch
    %21 = sbr.rel (0) target = $region21
  $region20: #{tpu_custom_call.1} parent=0 // pred_region
    _
  $region21: #{tpu_custom_call.1} parent=0 // pred_fallthru
    _
  // Predicated region
  $region22: #{tpu_custom_call.1} parent=0 // pred_check
    _
  $region23: #{tpu_custom_call.1} parent=0 // pred_check_branch
    %23 = sbr.rel (0) target = $region25
  $region24: #{tpu_custom_call.1} parent=0 // pred_region
    _
  $region25: #{tpu_custom_call.1} parent=0 // pred_fallthru
    _
  // Predicated region
  $region26: #{tpu_custom_call.1} parent=0 // pred_check
    _
  $region27: #{tpu_custom_call.1} parent=0 // pred_check_branch
    %25 = sbr.rel (0) target = $region29
  $region28: #{tpu_custom_call.1} parent=0 // pred_region
    _
  $region29: #{tpu_custom_call.1} parent=0 // pred_fallthru
    _
  %v26 = vld [vmem:[%s0] sm:$0xff]
  %v27 = vld [vmem:[%s0 + $0x8] sm:$0xff]
  %v28 = vld [vmem:[%s1] sm:$0xff]
  %v29 = vld [vmem:[%s1 + $0x8] sm:$0xff]
  %v30 = vld [vmem:[%s1 + $0x10] sm:$0xff]
  %v31 = vld [vmem:[%s1 + $0x18] sm:$0xff]
  %v32 = vld [vmem:[%s2] sm:$0xff]
  %v33 = vld [vmem:[%s2 + $0x8] sm:$0xff]
  %v34 = vld [vmem:[%s2 + $0x10] sm:$0xff]
  %v35 = vld [vmem:[%s2 + $0x18] sm:$0xff]
  %37 = vset.pattern.permute.xlu0 0
  %38 = vperm.xlu0 %37, %v32
  %v39 = vpop.permute.xlu0 %38
  %42 = vset.pattern.permute.xlu0 0
  %43 = vperm.xlu0 %42, %v33
  %v44 = vpop.permute.xlu0 %43
  %47 = vset.pattern.permute.xlu0 0
  %48 = vperm.xlu0 %47, %v34
  %v49 = vpop.permute.xlu0 %48
  %52 = vset.pattern.permute.xlu0 0
  %53 = vperm.xlu0 %52, %v35
  %v54 = vpop.permute.xlu0 %53
  %vm56 = vcmask 130048
  %v58 = vsel %vm56, %v28, 0
  %v61 = vsel %vm56, %v29, 0
  %v64 = vsel %vm56, %v30, 0
  %v67 = vsel %vm56, %v31, 0
  %69 = vmatprep.subr.mxu0 0.0
  %70 = vmatpush1.msra.mxu0 %v26
  %71 = vmatprep.subr.mxu0 0.0
  %72 = vmatpush1.msra.mxu0 %v27
  %73 = vmatprep.subr.mxu0 0.0
  %74 = vmatpush1.msra.mxu0 0.0
  %75 = vmatprep.subr.mxu0 0.0
  %76 = vmatpush1.msra.mxu0 0.0
  %77 = vmatprep.subr.mxu0 0.0
  %78 = vmatpush1.msra.mxu0 0.0
  %79 = vmatprep.subr.mxu0 0.0
  %80 = vmatpush1.msra.mxu0 0.0
  %81 = vmatprep.subr.mxu0 0.0
  %82 = vmatpush1.msra.mxu0 0.0
  %83 = vmatprep.subr.mxu0 0.0
  %84 = vmatpush1.msra.mxu0 0.0
  %85 = vmatprep.subr.mxu0 0.0
  %86 = vmatpush1.msra.mxu0 0.0
  %87 = vmatprep.subr.mxu0 0.0
  %88 = vmatpush1.msra.mxu0 0.0
  %89 = vmatprep.subr.mxu0 0.0
  %90 = vmatpush1.msra.mxu0 0.0
  %91 = vmatprep.subr.mxu0 0.0
  %92 = vmatpush1.msra.mxu0 0.0
  %93 = vmatprep.subr.mxu0 0.0
  %94 = vmatpush1.msra.mxu0 0.0
  %95 = vmatprep.subr.mxu0 0.0
  %96 = vmatpush1.msra.mxu0 0.0
  %97 = vmatprep.subr.mxu0 0.0
  %98 = vmatpush1.msra.mxu0 0.0
  %99 = vmatprep.subr.mxu0 0.0
  %100 = vmatpush1.msra.mxu0 0.0
  %101 = vmatprep.subr.mxu0 0.0
  %102 = vmatpush1.msra.mxu0 0.0
  %103 = vmatprep.subr.mxu0 0.0
  %104 = vmatpush1.msra.mxu0 0.0
  %105 = vmatprep.subr.mxu0 0.0
  %106 = vmatpush1.msra.mxu0 0.0
  %107 = vmatprep.subr.mxu0 0.0
  %108 = vmatpush1.msra.mxu0 0.0
  %109 = vmatprep.subr.mxu0 0.0
  %110 = vmatpush1.msra.mxu0 0.0
  %111 = vmatprep.subr.mxu0 0.0
  %112 = vmatpush1.msra.mxu0 0.0
  %113 = vmatprep.subr.mxu0 0.0
  %114 = vmatpush1.msra.mxu0 0.0
  %115 = vmatprep.subr.mxu0 0.0
  %116 = vmatpush1.msra.mxu0 0.0
  %117 = vmatprep.subr.mxu0 0.0
  %118 = vmatpush1.msra.mxu0 0.0
  %119 = vmatprep.subr.mxu0 0.0
  %120 = vmatpush1.msra.mxu0 0.0
  %121 = vmatprep.subr.mxu0 0.0
  %122 = vmatpush1.msra.mxu0 0.0
  %123 = vmatprep.subr.mxu0 0.0
  %124 = vmatpush1.msra.mxu0 0.0
  %125 = vmatprep.subr.mxu0 0.0
  %126 = vmatpush1.msra.mxu0 0.0
  %127 = vmatprep.subr.mxu0 0.0
  %128 = vmatpush1.msra.mxu0 0.0
  %129 = vmatprep.subr.mxu0 0.0
  %130 = vmatpush1.msra.mxu0 0.0
  %131 = vmatprep.subr.mxu0 0.0
  %132 = vmatpush1.msra.mxu0 0.0
  %133 = vmatprep.mubr.f32.mxu0 0.0
  %134 = vmatmul.mubr.f32.gmra.mrb[0].mxu0 %v58
  %v135 = vpop.f32.mrb[0].mxu0
  %v136 = vadd.f32 %v39, %v135
  %v137 = vpop.f32.mrb[0].mxu0
  %138 = vmatprep.mubr.f32.mxu0 0.0
  %139 = vmatmul.mubr.f32.gmra.mrb[0].mxu0 %v61
  %v140 = vpop.f32.mrb[0].mxu0
  %v141 = vadd.f32 %v44, %v140
  %v142 = vpop.f32.mrb[0].mxu0
  %143 = vmatprep.mubr.f32.mxu0 0.0
  %144 = vmatmul.mubr.f32.gmra.mrb[0].mxu0 %v64
  %v145 = vpop.f32.mrb[0].mxu0
  %v146 = vadd.f32 %v49, %v145
  %v147 = vpop.f32.mrb[0].mxu0
  %148 = vmatprep.mubr.f32.mxu0 0.0
  %149 = vmatmul.mubr.f32.gmra.mrb[0].mxu0 %v67
  %v150 = vpop.f32.mrb[0].mxu0
  %v151 = vadd.f32 %v54, %v150
  %v152 = vpop.f32.mrb[0].mxu0
  %153 = vdwg.mxu0
  %v154 = vmax.f32 %v136, 0.0
  %v155 = vmax.f32 %v141, 0.0
  %v156 = vmax.f32 %v146, 0.0
  %v157 = vmax.f32 %v151, 0.0
  %v158 = vld [vmem:[%s3] sm:$0xff]
  %v159 = vld [vmem:[%s3 + $0x8] sm:$0xff]
  %v160 = vld [vmem:[%s3 + $0x10] sm:$0xff]
  %v161 = vld [vmem:[%s3 + $0x18] sm:$0xff]
  %v162 = vld [vmem:[%s4] sm:$0xff]
  %v163 = vld [vmem:[%s4 + $0x8] sm:$0xff]
  %v164 = vld [vmem:[%s4 + $0x10] sm:$0xff]
  %v165 = vld [vmem:[%s4 + $0x18] sm:$0xff]
  %167 = vset.pattern.permute.xlu0 0
  %168 = vperm.xlu0 %167, %v162
  %v169 = vpop.permute.xlu0 %168
  %172 = vset.pattern.permute.xlu0 0
  %173 = vperm.xlu0 %172, %v163
  %v174 = vpop.permute.xlu0 %173
  %177 = vset.pattern.permute.xlu0 0
  %178 = vperm.xlu0 %177, %v164
  %v179 = vpop.permute.xlu0 %178
  %182 = vset.pattern.permute.xlu0 0
  %183 = vperm.xlu0 %182, %v165
  %v184 = vpop.permute.xlu0 %183
  %vm186 = vcmask 261120
  %v188 = vsel %vm186, %v158, 0
  %v191 = vsel %vm186, %v159, 0
  %v194 = vsel %vm186, %v160, 0
  %v197 = vsel %vm186, %v161, 0
  %199 = vmatprep.subr.mxu0 0.0
  %200 = vmatpush1.msra.mxu0 %v154
  %201 = vmatprep.subr.mxu0 0.0
  %202 = vmatpush1.msra.mxu0 %v155
  %203 = vmatprep.subr.mxu0 0.0
  %204 = vmatpush1.msra.mxu0 %v156
  %205 = vmatprep.subr.mxu0 0.0
  %206 = vmatpush1.msra.mxu0 %v157
  %207 = vmatprep.subr.mxu0 0.0
  %208 = vmatpush1.msra.mxu0 0.0
  %209 = vmatprep.subr.mxu0 0.0
  %210 = vmatpush1.msra.mxu0 0.0
  %211 = vmatprep.subr.mxu0 0.0
  %212 = vmatpush1.msra.mxu0 0.0
  %213 = vmatprep.subr.mxu0 0.0
  %214 = vmatpush1.msra.mxu0 0.0
  %215 = vmatprep.subr.mxu0 0.0
  %216 = vmatpush1.msra.mxu0 0.0
  %217 = vmatprep.subr.mxu0 0.0
  %218 = vmatpush1.msra.mxu0 0.0
  %219 = vmatprep.subr.mxu0 0.0
  %220 = vmatpush1.msra.mxu0 0.0
  %221 = vmatprep.subr.mxu0 0.0
  %222 = vmatpush1.msra.mxu0 0.0
  %223 = vmatprep.subr.mxu0 0.0
  %224 = vmatpush1.msra.mxu0 0.0
  %225 = vmatprep.subr.mxu0 0.0
  %226 = vmatpush1.msra.mxu0 0.0
  %227 = vmatprep.subr.mxu0 0.0
  %228 = vmatpush1.msra.mxu0 0.0
  %229 = vmatprep.subr.mxu0 0.0
  %230 = vmatpush1.msra.mxu0 0.0
  %231 = vmatprep.subr.mxu0 0.0
  %232 = vmatpush1.msra.mxu0 0.0
  %233 = vmatprep.subr.mxu0 0.0
  %234 = vmatpush1.msra.mxu0 0.0
  %235 = vmatprep.subr.mxu0 0.0
  %236 = vmatpush1.msra.mxu0 0.0
  %237 = vmatprep.subr.mxu0 0.0
  %238 = vmatpush1.msra.mxu0 0.0
  %239 = vmatprep.subr.mxu0 0.0
  %240 = vmatpush1.msra.mxu0 0.0
  %241 = vmatprep.subr.mxu0 0.0
  %242 = vmatpush1.msra.mxu0 0.0
  %243 = vmatprep.subr.mxu0 0.0
  %244 = vmatpush1.msra.mxu0 0.0
  %245 = vmatprep.subr.mxu0 0.0
  %246 = vmatpush1.msra.mxu0 0.0
  %247 = vmatprep.subr.mxu0 0.0
  %248 = vmatpush1.msra.mxu0 0.0
  %249 = vmatprep.subr.mxu0 0.0
  %250 = vmatpush1.msra.mxu0 0.0
  %251 = vmatprep.subr.mxu0 0.0
  %252 = vmatpush1.msra.mxu0 0.0
  %253 = vmatprep.subr.mxu0 0.0
  %254 = vmatpush1.msra.mxu0 0.0
  %255 = vmatprep.subr.mxu0 0.0
  %256 = vmatpush1.msra.mxu0 0.0
  %257 = vmatprep.subr.mxu0 0.0
  %258 = vmatpush1.msra.mxu0 0.0
  %259 = vmatprep.subr.mxu0 0.0
  %260 = vmatpush1.msra.mxu0 0.0
  %261 = vmatprep.subr.mxu0 0.0
  %262 = vmatpush1.msra.mxu0 0.0
  %263 = vmatprep.mubr.f32.mxu0 0.0
  %264 = vmatmul.mubr.f32.gmra.mrb[0].mxu0 %v188
  %v265 = vpop.f32.mrb[0].mxu0
  %v266 = vadd.f32 %v169, %v265
  %v267 = vpop.f32.mrb[0].mxu0
  %268 = vmatprep.mubr.f32.mxu0 0.0
  %269 = vmatmul.mubr.f32.gmra.mrb[0].mxu0 %v191
  %v270 = vpop.f32.mrb[0].mxu0
  %v271 = vadd.f32 %v174, %v270
  %v272 = vpop.f32.mrb[0].mxu0
  %273 = vmatprep.mubr.f32.mxu0 0.0
  %274 = vmatmul.mubr.f32.gmra.mrb[0].mxu0 %v194
  %v275 = vpop.f32.mrb[0].mxu0
  %v276 = vadd.f32 %v179, %v275
  %v277 = vpop.f32.mrb[0].mxu0
  %278 = vmatprep.mubr.f32.mxu0 0.0
  %279 = vmatmul.mubr.f32.gmra.mrb[0].mxu0 %v197
  %v280 = vpop.f32.mrb[0].mxu0
  %v281 = vadd.f32 %v184, %v280
  %v282 = vpop.f32.mrb[0].mxu0
  %283 = vdwg.mxu0
  %v284 = vmax.f32 %v266, 0.0
  %v285 = vmax.f32 %v271, 0.0
  %v286 = vmax.f32 %v276, 0.0
  %v287 = vmax.f32 %v281, 0.0
  %v288 = vld [vmem:[%s5] sm:$0xff]
  %v289 = vld [vmem:[%s5 + $0x8] sm:$0x1]
  %v290 = vld [vmem:[%s6] sm:$0xff]
  %v291 = vld [vmem:[%s6 + $0x8] sm:$0x1]
  %293 = vset.pattern.permute.xlu0 0
  %294 = vperm.xlu0 %293, %v290
  %v295 = vpop.permute.xlu0 %294
  %298 = vset.pattern.permute.xlu0 0
  %299 = vperm.xlu0 %298, %v291
  %v300 = vpop.permute.xlu0 %299
  %v303 = vsel %vm186, %v288, 0
  %v306 = vsel %vm186, %v289, 0
  %308 = vmatprep.subr.mxu0 0.0
  %309 = vmatpush1.msra.mxu0 %v284
  %310 = vmatprep.subr.mxu0 0.0
  %311 = vmatpush1.msra.mxu0 %v285
  %312 = vmatprep.subr.mxu0 0.0
  %313 = vmatpush1.msra.mxu0 %v286
  %314 = vmatprep.subr.mxu0 0.0
  %315 = vmatpush1.msra.mxu0 %v287
  %316 = vmatprep.subr.mxu0 0.0
  %317 = vmatpush1.msra.mxu0 0.0
  %318 = vmatprep.subr.mxu0 0.0
  %319 = vmatpush1.msra.mxu0 0.0
  %320 = vmatprep.subr.mxu0 0.0
  %321 = vmatpush1.msra.mxu0 0.0
  %322 = vmatprep.subr.mxu0 0.0
  %323 = vmatpush1.msra.mxu0 0.0
  %324 = vmatprep.subr.mxu0 0.0
  %325 = vmatpush1.msra.mxu0 0.0
  %326 = vmatprep.subr.mxu0 0.0
  %327 = vmatpush1.msra.mxu0 0.0
  %328 = vmatprep.subr.mxu0 0.0
  %329 = vmatpush1.msra.mxu0 0.0
  %330 = vmatprep.subr.mxu0 0.0
  %331 = vmatpush1.msra.mxu0 0.0
  %332 = vmatprep.subr.mxu0 0.0
  %333 = vmatpush1.msra.mxu0 0.0
  %334 = vmatprep.subr.mxu0 0.0
  %335 = vmatpush1.msra.mxu0 0.0
  %336 = vmatprep.subr.mxu0 0.0
  %337 = vmatpush1.msra.mxu0 0.0
  %338 = vmatprep.subr.mxu0 0.0
  %339 = vmatpush1.msra.mxu0 0.0
  %340 = vmatprep.subr.mxu0 0.0
  %341 = vmatpush1.msra.mxu0 0.0
  %342 = vmatprep.subr.mxu0 0.0
  %343 = vmatpush1.msra.mxu0 0.0
  %344 = vmatprep.subr.mxu0 0.0
  %345 = vmatpush1.msra.mxu0 0.0
  %346 = vmatprep.subr.mxu0 0.0
  %347 = vmatpush1.msra.mxu0 0.0
  %348 = vmatprep.subr.mxu0 0.0
  %349 = vmatpush1.msra.mxu0 0.0
  %350 = vmatprep.subr.mxu0 0.0
  %351 = vmatpush1.msra.mxu0 0.0
  %352 = vmatprep.subr.mxu0 0.0
  %353 = vmatpush1.msra.mxu0 0.0
  %354 = vmatprep.subr.mxu0 0.0
  %355 = vmatpush1.msra.mxu0 0.0
  %356 = vmatprep.subr.mxu0 0.0
  %357 = vmatpush1.msra.mxu0 0.0
  %358 = vmatprep.subr.mxu0 0.0
  %359 = vmatpush1.msra.mxu0 0.0
  %360 = vmatprep.subr.mxu0 0.0
  %361 = vmatpush1.msra.mxu0 0.0
  %362 = vmatprep.subr.mxu0 0.0
  %363 = vmatpush1.msra.mxu0 0.0
  %364 = vmatprep.subr.mxu0 0.0
  %365 = vmatpush1.msra.mxu0 0.0
  %366 = vmatprep.subr.mxu0 0.0
  %367 = vmatpush1.msra.mxu0 0.0
  %368 = vmatprep.subr.mxu0 0.0
  %369 = vmatpush1.msra.mxu0 0.0
  %370 = vmatprep.subr.mxu0 0.0
  %371 = vmatpush1.msra.mxu0 0.0
  %372 = vmatprep.mubr.f32.mxu0 0.0
  %373 = vmatmul.mubr.f32.gmra.mrb[0].mxu0 %v303
  %v374 = vpop.f32.mrb[0].mxu0
  %v375 = vadd.f32 %v295, %v374
  %v376 = vpop.f32.mrb[0].mxu0
  %377 = vmatprep.mubr.f32.mxu0 0.0
  %378 = vmatmul.mubr.f32.gmra.mrb[0].mxu0 %v306
  %v379 = vpop.f32.mrb[0].mxu0
  %v380 = vadd.f32 %v300, %v379
  %v381 = vpop.f32.mrb[0].mxu0
  %382 = vdwg.mxu0
  %v383 = vlaneseq
  %v384 = vshrl.u32 %v383, 7
  %v385 = vadd.s32 %v384, 8
  %vm386 = vcmp.lt.s32.totalorder %v384, 8
  %vm387 = vcmp.lt.s32.totalorder %v385, 8
  %v388 = vsel %vm386, %v375, -inf
  %v389 = vsel %vm387, %v380, -inf
  %vm390 = vcmask 64512
  %v391 = vsel %vm390, %v388, -inf
  %vm392 = vcmask 57344
  %v393 = vsel %vm392, %v389, -inf
  %v394 = vmax.f32 %v391, %v393
  %v395 = vrot.slane %v394, 4
  %v396 = vmax.f32 %v394, %v395
  %v397 = vrot.slane %v396, 2
  %v398 = vmax.f32 %v396, %v397
  %v399 = vrot.slane %v398, 1
  %v400 = vmax.f32 %v398, %v399
  %v401 = vsub.f32 %v388, %v400
  %v402 = vsub.f32 %v389, %v400
  %v403 = vmul.f32 %v401, 1.442695
  %v404 = vpow.pop %v403
  %v405 = vmul.f32 %v402, 1.442695
  %v406 = vpow.pop %v405
  %v407 = vsel %vm390, %v404, 0.0
  %v408 = vsel %vm392, %v406, 0.0
  %v409 = vadd.f32 %v407, %v408
  %v410 = vrot.slane %v409, 4
  %v411 = vadd.f32 %v409, %v410
  %v412 = vrot.slane %v411, 2
  %v413 = vadd.f32 %v411, %v412
  %v414 = vrot.slane %v413, 1
  %v415 = vadd.f32 %v413, %v414
  %v416 = vrcp.pop %v415
  %v417 = vmul.f32 %v404, %v416
  %v418 = vmul.f32 %v406, %v416
  %v419 = vsel %vm386, %v417, %v375
  %v420 = vsel %vm387, %v418, %v380
  %421 = vst.msk [vmem:[%s7] sm:$0xff] %vm390, %v419
  %422 = vst.msk [vmem:[%s7 + $0x8] sm:$0x1] %vm392, %v420
  // Predicated region
  $region30: #{tpu_custom_call.1} parent=0 // pred_check
    _
  $region31: #{tpu_custom_call.1} parent=0 // pred_check_branch
    %424 = sbr.rel (0) target = $region33
  $region32: #{tpu_custom_call.1} parent=0 // pred_region
    _
  $region33: #{tpu_custom_call.1} parent=0 // pred_fallthru
    _
  // Predicated region
  $region34: #{tpu_custom_call.1} parent=0 // pred_check
    _
  $region35: #{tpu_custom_call.1} parent=0 // pred_check_branch
    %426 = sbr.rel (0) target = $region37
  $region36: #{tpu_custom_call.1} parent=0 // pred_region
    _
  $region37: #{tpu_custom_call.1} parent=0 // pred_fallthru
    _

</llo_original>
